<compile_context>
chip_gen: v7x
topology: tpu7x:2x2x1
jax: 0.10.0
libtpu: 0.0.40
codegen_flags: <defaults>
</compile_context>

<pallas_src>
import functools

import jax
import jax.numpy as jnp
from jax.experimental import pallas as pl
from jax.experimental.pallas import tpu as pltpu


def _round_up(x: int, m: int) -> int:
    return ((x + m - 1) // m) * m


def _sublane_packing(itemsize: int) -> int:
    # rows per vreg for the dtype: f32 -> 8, bf16/f16 -> 16, int8/fp8 -> 32
    return {4: 8, 2: 16, 1: 32}.get(itemsize, 8)


def _vmem_capacity_bytes() -> int:
    """Physical VMEM per core; falls back to the smallest (v7x) size."""
    try:
        info = pltpu.get_tpu_info()
        return int(getattr(info, "vmem_capacity_bytes", 64 * 1024 * 1024))
    except Exception:
        return 64 * 1024 * 1024


def _pick_tiling(rows: int, hidden: int, itemsize: int):
    """Return (rows_tile, vmem_limit_bytes), generation-aware."""
    vmem_cap = _vmem_capacity_bytes()
    large_vmem = vmem_cap >= 128 * 1024 * 1024  # v5e / v6e
    if large_vmem:
        vmem_limit = 96 * 1024 * 1024
        budget = (vmem_limit * 3) // 4
        max_rows_tile = 1024
        two_cores = False
    else:
        # v7x-sized VMEM (64 MiB) or unknown: conservative, assume 2 TCs.
        vmem_limit = 48 * 1024 * 1024
        budget = vmem_limit // 2
        max_rows_tile = 512
        two_cores = True

    packing = _sublane_packing(itemsize)
    # Per-row pipeline bytes: double-buffered input + output tiles (x dtype)
    # plus ~2 tiles worth of f32 working set for the normalize math.
    bytes_per_row = hidden * itemsize * 4 + hidden * 4 * 2
    max_by_vmem = max(packing, budget // max(bytes_per_row, 1))
    tile = min(max_rows_tile, max_by_vmem, _round_up(rows, packing))

    if two_cores:
        # Keep both v7x TensorCores busy: aim for >= ~8 grid steps per core
        # (the row axis is marked "parallel" and sharded across cores).
        min_steps = 16
        cap = ((rows // min_steps) // packing) * packing
        if cap >= packing:
            tile = min(tile, cap)

    tile = max(packing, (tile // packing) * packing)
    return tile, vmem_limit


def _rmsnorm_kernel(x_ref, w_ref, o_ref, *, eps: float, inv_hidden: float):
    # Weight block is resident (constant index_map) and already in o_ref.dtype.
    w = w_ref[...]

    # Single load of the tile; f32 copy reused for reduce AND normalize.
    x32 = x_ref[...].astype(jnp.float32)
    sum_sq = jnp.sum(x32 * x32, axis=-1, keepdims=True)
    inv_rms = jax.lax.rsqrt(sum_sq * inv_hidden + eps)

    # type_as(x) happens BEFORE the weight multiply (exact PyTorch semantics).
    o_ref[...] = (x32 * inv_rms).astype(o_ref.dtype) * w


def mistral_rmsnorm(x: jax.Array, weight: jax.Array, eps: float = 1e-6,
                    rows_tile: int | None = None) -> jax.Array:
    """RMSNorm over the last axis of x, weight shape = (hidden,)."""
    orig_shape = x.shape
    hidden = orig_shape[-1]
    x2d = x.reshape(-1, hidden)
    rows = x2d.shape[0]

    itemsize = jnp.dtype(x.dtype).itemsize
    if rows_tile is None:
        rows_tile, vmem_limit = _pick_tiling(rows, hidden, itemsize)
    else:
        _, vmem_limit = _pick_tiling(rows, hidden, itemsize)

    # Cast the weight once outside the kernel (also halves weight DMA if the
    # parameter arrives as f32).
    w2d = weight.astype(x.dtype).reshape(1, hidden)

    grid = (pl.cdiv(rows, rows_tile),)

    cost = pl.CostEstimate(
        flops=6 * rows * hidden,
        transcendentals=rows,
        bytes_accessed=2 * rows * hidden * itemsize + hidden * itemsize,
    )

    out = pl.pallas_call(
        functools.partial(_rmsnorm_kernel, eps=eps, inv_hidden=1.0 / hidden),
        out_shape=jax.ShapeDtypeStruct((rows, hidden), x.dtype),
        grid_spec=pltpu.PrefetchScalarGridSpec(
            num_scalar_prefetch=0,
            grid=grid,
            in_specs=[
                pl.BlockSpec((rows_tile, hidden), lambda i: (i, 0)),
                pl.BlockSpec((1, hidden), lambda i: (0, 0)),
            ],
            out_specs=pl.BlockSpec((rows_tile, hidden), lambda i: (i, 0)),
        ),
        compiler_params=pltpu.CompilerParams(
            dimension_semantics=("parallel",),   # lets v7x shard rows across its 2 TCs
            vmem_limit_bytes=vmem_limit,
        ),
        cost_estimate=cost,
    )(x2d, w2d)

    return out.reshape(orig_shape)


def _reference(x, weight, eps=1e-6):
    xf = x.astype(jnp.float32)
    normed = xf * jax.lax.rsqrt(jnp.mean(xf * xf, axis=-1, keepdims=True) + eps)
    return normed.astype(x.dtype) * weight.astype(x.dtype)


if __name__ == "__main__":
    key = jax.random.PRNGKey(0)
    batch, seq, n_embd = 2, 8, 32
    dtype = jnp.bfloat16

    x = jax.random.normal(key, (batch, seq, n_embd), dtype=jnp.float32).astype(dtype)
    # Deterministic parameter init: nn.Parameter(torch.ones(n_embd, dtype=dtype))
    weight = jnp.ones((n_embd,), dtype=dtype)

    out = mistral_rmsnorm(x, weight, eps=1e-6)
    jax.block_until_ready(out)

    ref = _reference(x, weight, eps=1e-6)
    assert out.shape == x.shape and out.dtype == x.dtype
    assert jnp.allclose(out.astype(jnp.float32), ref.astype(jnp.float32),
                        atol=1e-2, rtol=1e-2)

    # Non-divisible row count (decode-style) exercises the masked partial-block
    # path (no pad / slice round-trip anymore).
    x_tail = x[:, :3, :]                      # 6 rows, not a tile multiple
    out_tail = mistral_rmsnorm(x_tail, weight, eps=1e-6)
    jax.block_until_ready(out_tail)
    ref_tail = _reference(x_tail, weight, eps=1e-6)
    assert out_tail.shape == x_tail.shape and out_tail.dtype == x_tail.dtype
    assert jnp.allclose(out_tail.astype(jnp.float32), ref_tail.astype(jnp.float32),
                        atol=1e-2, rtol=1e-2)

    # f32 activations take the same path with a different sublane packing.
    x_f32 = x.astype(jnp.float32)
    out_f32 = mistral_rmsnorm(x_f32, weight.astype(jnp.float32), eps=1e-6)
    jax.block_until_ready(out_f32)
    ref_f32 = _reference(x_f32, weight.astype(jnp.float32), eps=1e-6)
    assert jnp.allclose(out_f32, ref_f32, atol=1e-5, rtol=1e-5)

    print("KERNEL_OK")
</pallas_src>

<mosaic_0001>
module attributes {stable_mosaic.version = 11 : i64} {
  func.func @_rmsnorm_kernel(%arg0: i32, %arg1: memref<16x32xbf16, #tpu.memory_space<vmem>>, %arg2: memref<1x32xbf16, #tpu.memory_space<vmem>>, %arg3: memref<16x32xbf16, #tpu.memory_space<vmem>>) attributes {dimension_semantics = [#tpu.dimension_semantics<parallel>], iteration_bounds = array<i64: 1>, scalar_prefetch = 0 : i64, scratch_operands = 0 : i64, tpu.core_type = #tpu.core_type<tc>, window_params = [{transform_indices = @transform_0, window_bounds = array<i64: 16, 32>}, {pipeline_mode = #tpu.pipeline_mode<synchronous>, transform_indices = @transform_1, window_bounds = array<i64: 1, 32>}, {transform_indices = @transform_2, window_bounds = array<i64: 16, 32>}]} {
    %c0 = arith.constant 0 : index
    %c0_0 = arith.constant 0 : index
    %0 = vector.load %arg2[%c0, %c0_0] : memref<1x32xbf16, #tpu.memory_space<vmem>>, vector<1x32xbf16>
    %c0_1 = arith.constant 0 : index
    %c0_2 = arith.constant 0 : index
    %1 = vector.load %arg1[%c0_1, %c0_2] : memref<16x32xbf16, #tpu.memory_space<vmem>>, vector<16x32xbf16>
    %2 = arith.extf %1 : vector<16x32xbf16> to vector<16x32xf32>
    %3 = arith.mulf %2, %2 : vector<16x32xf32>
    %cst = arith.constant dense<0.000000e+00> : vector<16xf32>
    %4 = vector.multi_reduction <add>, %3, %cst [1] : vector<16x32xf32> to vector<16xf32>
    %5 = vector.shape_cast %4 : vector<16xf32> to vector<16x1xf32>
    %cst_3 = arith.constant 3.125000e-02 : f32
    %6 = vector.broadcast %cst_3 : f32 to vector<16x1xf32>
    %7 = arith.mulf %5, %6 : vector<16x1xf32>
    %cst_4 = arith.constant 9.99999997E-7 : f32
    %8 = vector.broadcast %cst_4 : f32 to vector<16x1xf32>
    %9 = arith.addf %7, %8 : vector<16x1xf32>
    %10 = math.rsqrt %9 : vector<16x1xf32>
    %11 = vector.broadcast %10 : vector<16x1xf32> to vector<16x32xf32>
    %12 = arith.mulf %2, %11 : vector<16x32xf32>
    %13 = arith.truncf %12 : vector<16x32xf32> to vector<16x32xbf16>
    %14 = vector.broadcast %0 : vector<1x32xbf16> to vector<16x32xbf16>
    %15 = arith.mulf %13, %14 : vector<16x32xbf16>
    %c0_5 = arith.constant 0 : index
    %c0_6 = arith.constant 0 : index
    %16 = vector.load %arg3[%c0_5, %c0_6] : memref<16x32xbf16, #tpu.memory_space<vmem>>, vector<16x32xbf16>
    tpu.vector_store %arg3[%c0_5, %c0_6], %15 {strides = array<i32>} : memref<16x32xbf16, #tpu.memory_space<vmem>>, vector<16x32xbf16>,
    return
  }
  func.func @transform_0(%arg0: i32) -> (i32, i32) {
    %c0_i32 = arith.constant 0 : i32
    %c0_i32_0 = arith.constant 0 : i32
    return %arg0, %c0_i32 : i32, i32
  }
  func.func @transform_1(%arg0: i32) -> (i32, i32) {
    %c0_i32 = arith.constant 0 : i32
    %c0_i32_0 = arith.constant 0 : i32
    %c0_i32_1 = arith.constant 0 : i32
    return %c0_i32, %c0_i32_0 : i32, i32
  }
  func.func @transform_2(%arg0: i32) -> (i32, i32) {
    %c0_i32 = arith.constant 0 : i32
    %c0_i32_0 = arith.constant 0 : i32
    return %arg0, %c0_i32 : i32, i32
  }
}

</mosaic_0001>

<llo_original>
// kernel: tpu_custom_call.1
$region0: #{tpu_custom_call.1}
  #allocation0 [shape = 'u32[]', space=smem, size = 0x4, offset = 0x4, fixed_abs, tag = 'smem constant byte address 0x4 - core index']
  #allocation1 [shape = 'u32[144,128]{1,0:T(1,128)}', space=vmem, size = 0x12000, scoped, tag = 'internal scratch']
  %s0 = inlined_call_operand.hbm [shape: bf16[16,32], index: 0, kind: input, shape index: {}]
  %s1 = inlined_call_operand.vmem [shape: bf16[1,32], index: 1, kind: input, shape index: {}]
  %s2 = inlined_call_operand.hbm [shape: bf16[16,32], index: 2, kind: output, shape index: {}]
  %s3 = sld [smem:[#allocation0]]
  $region22: #{tpu_custom_call.1} parent=0
    _
  %s5 = ssub.s32 1, %s3
  %s6 = scalar_select 0, %s5, %s3
  $region1: #{tpu_custom_call.1} parent=0
    #allocation2 [shape = 'u8[4096]{0}', space=vmem, size = 0x1000, scoped, tag = 'input window, operand 0, single buffered']
    #allocation3 [shape = 's32[1]{0}', space=sflag, size = 0x4, scoped, tag = 'scoped memory for tpu_custom_call.1']
    #allocation4 [shape = 's32[1]{0}', space=sflag, size = 0x4, scoped, tag = 'scoped memory for tpu_custom_call.1']
    #allocation5 [shape = 'u8[4096]{0}', space=vmem, size = 0x1000, scoped, tag = 'output window, operand 0, single buffered']
    %7 = vsyncpa [#allocation3], 0
    %8 = vsyncpa [#allocation4], 0
    // Predicated region
    $region2: #{tpu_custom_call.1} parent=1 // pred_check
      _
    $region3: #{tpu_custom_call.1} parent=1 // pred_check_branch
      %10 = sbr.rel (0) target = $region5
    $region4: #{tpu_custom_call.1} parent=1 // pred_region
      %s12 = ssub.s32 128, 128
      %13 = vsyncadd [#allocation3], %s12
      %s14 = sshll.u32 [#allocation2], 4
      %s15 = int_to_ptr.vmem [resolvable:$true] %s14
      %20 = dma.hbm_to_vmem [thread:$0]  %s0, 128, %s15, [#allocation3], 64, 64, 4
    $region5: #{tpu_custom_call.1} parent=1 // pred_fallthru
      _
    // Predicated region
    $region6: #{tpu_custom_call.1} parent=1 // pred_check
      _
    $region7: #{tpu_custom_call.1} parent=1 // pred_check_branch
      %22 = sbr.rel (0) target = $region9
    $region8: #{tpu_custom_call.1} parent=1 // pred_region
      _
    $region9: #{tpu_custom_call.1} parent=1 // pred_fallthru
      _
    // Predicated region
    $region10: #{tpu_custom_call.1} parent=1 // pred_check
      _
    $region11: #{tpu_custom_call.1} parent=1 // pred_check_branch
      %24 = sbr.rel (0) target = $region13
    $region12: #{tpu_custom_call.1} parent=1 // pred_region
      %25 = dma.done [#allocation3], 128
    $region13: #{tpu_custom_call.1} parent=1 // pred_fallthru
      _
    %v26 = vld [vmem:[%s1] sm:$0x1]
    %v27 = vld [vmem:[#allocation2] sm:$0xf]
    %v28 = vld [vmem:[#allocation2 + $0x4] sm:$0xf]
    %v29 = vunpack.c.l.bf16 %v27
    %v30 = vunpack.c.l.bf16 %v28
    %v31 = vmul.f32 %v29, %v29
    %v32 = vmul.f32 %v30, %v30
    %vm33 = vcmask 261120
    %v34 = vsel %vm33, %v31, 0.0
    %35 = vadd.xlane.f32.xlu0 %v34
    %v36 = vpop.xlane.xlu0 %35
    %v37 = vsel %vm33, %v32, 0.0
    %38 = vadd.xlane.f32.xlu0 %v37
    %v39 = vpop.xlane.xlu0 %38
    %v40 = vmul.f32 %v36, 0.03125
    %v41 = vmul.f32 %v39, 0.03125
    %v42 = vadd.f32 %v40, 1e-06
    %v43 = vadd.f32 %v41, 1e-06
    %v44 = vrsqrt.pop %v42
    %v45 = vrsqrt.pop %v43
    %v46 = vmul.f32 %v29, %v44
    %v47 = vmul.f32 %v30, %v45
    %v48 = vpack.c.bf16 %v47, %v46
    %v50 = vpack.i.b16 %v26, %v26
    %v52 = vlaneseq
    %v53 = vshrl.u32 %v52, 7
    %v54 = vsub.s32 0, %v53
    %v55 = vrot.slane %v50, %v54
    %v56 = vmul.bf16 %v48, %v55
    %v58 = vunpack.c.l.b16 %v56
    %v59 = vunpack.c.h.b16 %v56
    %v60 = vpack.c.b16 %v58, %v58
    %v61 = vpack.c.b16 %v59, %v59
    %vm64 = vcmask 257024
    %65 = vst.msk [vmem:[#allocation5] sm:$0xf] %vm64, %v60
    %66 = vst.msk [vmem:[#allocation5 + $0x4] sm:$0xf] %vm64, %v61
    // Predicated region
    $region14: #{tpu_custom_call.1} parent=1 // pred_check
      _
    $region15: #{tpu_custom_call.1} parent=1 // pred_check_branch
      %68 = sbr.rel (0) target = $region17
    $region16: #{tpu_custom_call.1} parent=1 // pred_region
      %s70 = ssub.s32 128, 128
      %71 = vsyncadd [#allocation4], %s70
      %s72 = sshll.u32 [#allocation5], 4
      %s73 = int_to_ptr.vmem [resolvable:$true] %s72
      %78 = dma.vmem_to_hbm [thread:$0]  %s73, 128, %s2, [#allocation4], 64, 64, 4
    $region17: #{tpu_custom_call.1} parent=1 // pred_fallthru
      _
    // Predicated region
    $region18: #{tpu_custom_call.1} parent=1 // pred_check
      _
    $region19: #{tpu_custom_call.1} parent=1 // pred_check_branch
      %80 = sbr.rel (0) target = $region21
    $region20: #{tpu_custom_call.1} parent=1 // pred_region
      %81 = dma.done [#allocation4], 128
    $region21: #{tpu_custom_call.1} parent=1 // pred_fallthru
      _
    %82 = vsyncpa [#allocation3], 1
    %83 = vsyncpa [#allocation4], 1

</llo_original>
